<compile_context>
chip_gen: v7x
topology: tpu7x:2x2x1
jax: 0.10.0
libtpu: 0.0.40
codegen_flags: <defaults>
</compile_context>

<pallas_src>
import functools

import jax
import jax.numpy as jnp
from jax.experimental import pallas as pl
from jax.experimental.pallas import tpu as pltpu


_VMEM_LIMIT_BYTES = 32 * 1024 * 1024  # safe scoped-VMEM ceiling on v5e/v6e/v7x


def _scaling_kernel(x_ref, s_ref, y_ref, *, reverse: bool, eps: float):
    # s_ref: (1, D) log-scale parameter.  All scale work is O(dim), off the
    # per-element path; the (TB, D) broadcast happens inside the multiply.
    scale = jnp.exp(s_ref[...].astype(jnp.float32)) + eps            # (1, D)
    if reverse:
        # Exact reciprocal on the (1, D) row only (O(dim)); keeps parity with
        # PyTorch's divide to within one float rounding while the per-element
        # work stays a single VPU multiply.
        scale = pl.reciprocal(scale, approx=False)
    y_ref[...] = (x_ref[...] * scale).astype(y_ref.dtype)            # (TB, D)


def _choose_tile_b(batch: int, dim: int, itemsize: int) -> int:
    """Largest batch tile whose double-buffered x+y tiles fit the VMEM budget."""
    # 2 buffers for the x tile + 2 for the y tile, with ~2x headroom under the
    # explicit 32 MiB scoped-VMEM limit (scale row + scratch are negligible).
    tile_budget = _VMEM_LIMIT_BYTES // 2
    max_rows = max(tile_budget // (4 * dim * itemsize), 1)
    tile_b = min(batch, max_rows, 1024)
    if tile_b < batch:
        # Partial-batch tiles: second-to-last block dim must be a multiple of 8
        # (or equal the full array dim, which the tile_b == batch case covers).
        tile_b = max((tile_b // 8) * 8, 8)
    return tile_b


def scaling_forward(x, log_scale, *, reverse: bool = False, eps: float = 1e-5):
    """Pallas implementation of Scaling.forward.

    Args:
        x:         (batch, dim) float32/bfloat16 input.
        log_scale: (1, dim) float32 parameter (the nn.Parameter `scale`).
        reverse:   True -> inference mode (divide), False -> sampling (multiply).
        eps:       numerical epsilon added to exp(scale).
    Returns:
        (y, log_det): y has shape (batch, dim) and x.dtype; log_det has shape (1,).
    """
    batch, dim = x.shape
    assert log_scale.shape == (1, dim)

    tile_b = _choose_tile_b(batch, dim, jnp.dtype(x.dtype).itemsize)
    grid = (pl.cdiv(batch, tile_b),)

    kernel = functools.partial(_scaling_kernel, reverse=reverse, eps=eps)

    y = pl.pallas_call(
        kernel,
        out_shape=jax.ShapeDtypeStruct((batch, dim), x.dtype),
        grid=grid,
        in_specs=[
            # x: tiled over batch, full dim (block last dim == array dim, so
            # the (8,128) rule is satisfied even for small/odd dim).
            pl.BlockSpec((tile_b, dim), lambda i: (i, 0)),
            # scale row: same block every step -> stays resident in VMEM.
            pl.BlockSpec((1, dim), lambda i: (0, 0)),
        ],
        out_specs=pl.BlockSpec((tile_b, dim), lambda i: (i, 0)),
        compiler_params=pltpu.CompilerParams(
            dimension_semantics=("parallel",),
            vmem_limit_bytes=_VMEM_LIMIT_BYTES,
        ),
    )(x, log_scale)

    # log_det is O(dim) and independent of x — compute it outside the
    # bandwidth-bound kernel (matches torch.sum(torch.log(scale), dim=1)).
    scale = jnp.exp(log_scale.astype(jnp.float32)) + eps
    log_det = jnp.sum(jnp.log(scale), axis=1)  # shape (1,)

    return y, log_det


if __name__ == "__main__":
    key = jax.random.PRNGKey(0)
    batch, dim = 8, 32
    eps = 1e-5

    kx, ks = jax.random.split(key)
    x = jax.random.normal(kx, (batch, dim), dtype=jnp.float32)
    # PyTorch inits the parameter to zeros; use small deterministic values so
    # the scaling is non-trivial but reproducible.
    log_scale = 0.1 * jax.random.normal(ks, (1, dim), dtype=jnp.float32)

    # Forward (sampling) mode and reverse (inference) mode.
    y_fwd, ld_fwd = scaling_forward(x, log_scale, reverse=False, eps=eps)
    y_rev, ld_rev = scaling_forward(x, log_scale, reverse=True, eps=eps)
    jax.block_until_ready((y_fwd, ld_fwd, y_rev, ld_rev))

    # Reference check in plain JAX.
    scale_ref = jnp.exp(log_scale) + eps
    ld_ref = jnp.sum(jnp.log(scale_ref), axis=1)
    assert y_fwd.shape == (batch, dim) and y_fwd.dtype == x.dtype
    assert ld_fwd.shape == (1,)
    assert jnp.allclose(y_fwd, x * scale_ref, rtol=1e-5, atol=1e-5)
    assert jnp.allclose(y_rev, x / scale_ref, rtol=1e-5, atol=1e-5)
    assert jnp.allclose(ld_fwd, ld_ref, rtol=1e-5, atol=1e-5)
    assert jnp.allclose(ld_rev, ld_ref, rtol=1e-5, atol=1e-5)

    # bf16 I/O sanity check (kernel casts the store to y_ref.dtype).
    x_bf16 = x.astype(jnp.bfloat16)
    y_bf16, _ = scaling_forward(x_bf16, log_scale, reverse=False, eps=eps)
    jax.block_until_ready(y_bf16)
    assert y_bf16.dtype == jnp.bfloat16
    assert jnp.allclose(y_bf16.astype(jnp.float32),
                        x_bf16.astype(jnp.float32) * scale_ref,
                        rtol=2e-2, atol=2e-2)

    # Larger shape to exercise batch tiling / partial last tile.
    xb = jax.random.normal(kx, (300, 256), dtype=jnp.float32)
    sb = 0.05 * jax.random.normal(ks, (1, 256), dtype=jnp.float32)
    yb, ldb = scaling_forward(xb, sb, reverse=False, eps=eps)
    jax.block_until_ready((yb, ldb))
    sb_ref = jnp.exp(sb) + eps
    assert jnp.allclose(yb, xb * sb_ref, rtol=1e-5, atol=1e-5)
    assert jnp.allclose(ldb, jnp.sum(jnp.log(sb_ref), axis=1), rtol=1e-5, atol=1e-5)

    print("KERNEL_OK")
</pallas_src>

<mosaic_0001>
module attributes {stable_mosaic.version = 11 : i64} {
  func.func @_scaling_kernel(%arg0: i32, %arg1: memref<8x32xf32, #tpu.memory_space<vmem>>, %arg2: memref<1x32xf32, #tpu.memory_space<vmem>>, %arg3: memref<8x32xf32, #tpu.memory_space<vmem>>) attributes {dimension_semantics = [#tpu.dimension_semantics<parallel>], iteration_bounds = array<i64: 1>, scalar_prefetch = 0 : i64, scratch_operands = 0 : i64, tpu.core_type = #tpu.core_type<tc>, window_params = [{transform_indices = @transform_0, window_bounds = array<i64: 8, 32>}, {pipeline_mode = #tpu.pipeline_mode<synchronous>, transform_indices = @transform_1, window_bounds = array<i64: 1, 32>}, {transform_indices = @transform_2, window_bounds = array<i64: 8, 32>}]} {
    %c0 = arith.constant 0 : index
    %c0_0 = arith.constant 0 : index
    %0 = vector.load %arg2[%c0, %c0_0] : memref<1x32xf32, #tpu.memory_space<vmem>>, vector<1x32xf32>
    %1 = math.exp %0 : vector<1x32xf32>
    %cst = arith.constant 9.99999974E-6 : f32
    %2 = vector.broadcast %cst : f32 to vector<1x32xf32>
    %3 = arith.addf %1, %2 : vector<1x32xf32>
    %c0_1 = arith.constant 0 : index
    %c0_2 = arith.constant 0 : index
    %4 = vector.load %arg1[%c0_1, %c0_2] : memref<8x32xf32, #tpu.memory_space<vmem>>, vector<8x32xf32>
    %5 = vector.broadcast %3 : vector<1x32xf32> to vector<8x32xf32>
    %6 = arith.mulf %4, %5 : vector<8x32xf32>
    %c0_3 = arith.constant 0 : index
    %c0_4 = arith.constant 0 : index
    %7 = vector.load %arg3[%c0_3, %c0_4] : memref<8x32xf32, #tpu.memory_space<vmem>>, vector<8x32xf32>
    tpu.vector_store %arg3[%c0_3, %c0_4], %6 {strides = array<i32>} : memref<8x32xf32, #tpu.memory_space<vmem>>, vector<8x32xf32>,
    return
  }
  func.func @transform_0(%arg0: i32) -> (i32, i32) {
    %c0_i32 = arith.constant 0 : i32
    %c0_i32_0 = arith.constant 0 : i32
    return %arg0, %c0_i32 : i32, i32
  }
  func.func @transform_1(%arg0: i32) -> (i32, i32) {
    %c0_i32 = arith.constant 0 : i32
    %c0_i32_0 = arith.constant 0 : i32
    %c0_i32_1 = arith.constant 0 : i32
    return %c0_i32, %c0_i32_0 : i32, i32
  }
  func.func @transform_2(%arg0: i32) -> (i32, i32) {
    %c0_i32 = arith.constant 0 : i32
    %c0_i32_0 = arith.constant 0 : i32
    return %arg0, %c0_i32 : i32, i32
  }
}

</mosaic_0001>

<llo_original>
// kernel: tpu_custom_call.1
$region0: #{tpu_custom_call.1}
  #allocation0 [shape = 'u32[]', space=smem, size = 0x4, offset = 0x4, fixed_abs, tag = 'smem constant byte address 0x4 - core index']
  #allocation1 [shape = 'u32[144,128]{1,0:T(1,128)}', space=vmem, size = 0x12000, scoped, tag = 'internal scratch']
  %s0 = inlined_call_operand.hbm [shape: f32[8,32], index: 0, kind: input, shape index: {}]
  %s1 = inlined_call_operand.vmem [shape: f32[1,32], index: 1, kind: input, shape index: {}]
  %s2 = inlined_call_operand.hbm [shape: f32[8,32], index: 2, kind: output, shape index: {}]
  %s3 = sld [smem:[#allocation0]]
  $region22: #{tpu_custom_call.1} parent=0
    _
  %s5 = ssub.s32 1, %s3
  %s6 = scalar_select 0, %s5, %s3
  $region1: #{tpu_custom_call.1} parent=0
    #allocation2 [shape = 'u8[4096]{0}', space=vmem, size = 0x1000, scoped, tag = 'input window, operand 0, single buffered']
    #allocation3 [shape = 's32[1]{0}', space=sflag, size = 0x4, scoped, tag = 'scoped memory for tpu_custom_call.1']
    #allocation4 [shape = 's32[1]{0}', space=sflag, size = 0x4, scoped, tag = 'scoped memory for tpu_custom_call.1']
    #allocation5 [shape = 'u8[4096]{0}', space=vmem, size = 0x1000, scoped, tag = 'output window, operand 0, single buffered']
    %7 = vsyncpa [#allocation3], 0
    %8 = vsyncpa [#allocation4], 0
    // Predicated region
    $region2: #{tpu_custom_call.1} parent=1 // pred_check
      _
    $region3: #{tpu_custom_call.1} parent=1 // pred_check_branch
      %10 = sbr.rel (0) target = $region5
    $region4: #{tpu_custom_call.1} parent=1 // pred_region
      %s12 = ssub.s32 128, 128
      %13 = vsyncadd [#allocation3], %s12
      %s15 = sshll.u32 [#allocation2], 4
      %s16 = int_to_ptr.vmem [resolvable:$true] %s15
      %18 = dma.hbm_to_vmem [thread:$0]  %s0, 128, %s16, [#allocation3]
    $region5: #{tpu_custom_call.1} parent=1 // pred_fallthru
      _
    // Predicated region
    $region6: #{tpu_custom_call.1} parent=1 // pred_check
      _
    $region7: #{tpu_custom_call.1} parent=1 // pred_check_branch
      %20 = sbr.rel (0) target = $region9
    $region8: #{tpu_custom_call.1} parent=1 // pred_region
      _
    $region9: #{tpu_custom_call.1} parent=1 // pred_fallthru
      _
    // Predicated region
    $region10: #{tpu_custom_call.1} parent=1 // pred_check
      _
    $region11: #{tpu_custom_call.1} parent=1 // pred_check_branch
      %22 = sbr.rel (0) target = $region13
    $region12: #{tpu_custom_call.1} parent=1 // pred_region
      %23 = dma.done [#allocation3], 128
    $region13: #{tpu_custom_call.1} parent=1 // pred_fallthru
      _
    %v24 = vld [vmem:[%s1] sm:$0x1]
    %v25 = vmul.f32 %v24, 1.442695
    %v26 = vpow.pop %v25
    %v27 = vadd.f32 %v26, 1e-05
    %v28 = vld [vmem:[#allocation2] sm:$0xff]
    %v30 = vlaneseq
    %v31 = vshrl.u32 %v30, 7
    %v32 = vsub.s32 0, %v31
    %v33 = vrot.slane %v27, %v32
    %v35 = vmul.f32 %v28, %v33
    %vm36 = vcmask 261120
    %37 = vst.msk [vmem:[#allocation5] sm:$0xff] %vm36, %v35
    // Predicated region
    $region14: #{tpu_custom_call.1} parent=1 // pred_check
      _
    $region15: #{tpu_custom_call.1} parent=1 // pred_check_branch
      %39 = sbr.rel (0) target = $region17
    $region16: #{tpu_custom_call.1} parent=1 // pred_region
      %s41 = ssub.s32 128, 128
      %42 = vsyncadd [#allocation4], %s41
      %s44 = sshll.u32 [#allocation5], 4
      %s45 = int_to_ptr.vmem [resolvable:$true] %s44
      %47 = dma.vmem_to_hbm [thread:$0]  %s45, 128, %s2, [#allocation4]
    $region17: #{tpu_custom_call.1} parent=1 // pred_fallthru
      _
    // Predicated region
    $region18: #{tpu_custom_call.1} parent=1 // pred_check
      _
    $region19: #{tpu_custom_call.1} parent=1 // pred_check_branch
      %49 = sbr.rel (0) target = $region21
    $region20: #{tpu_custom_call.1} parent=1 // pred_region
      %50 = dma.done [#allocation4], 128
    $region21: #{tpu_custom_call.1} parent=1 // pred_fallthru
      _
    %51 = vsyncpa [#allocation3], 1
    %52 = vsyncpa [#allocation4], 1

</llo_original>
